<compile_context>
chip_gen: v7x
topology: tpu7x:2x2x1
jax: 0.10.0
libtpu: 0.0.40
codegen_flags: <defaults>
</compile_context>

<pallas_src>
import functools

import jax
import jax.numpy as jnp
from jax import lax
from jax.experimental import pallas as pl
from jax.experimental.pallas import tpu as pltpu


def _round_up(x, m):
    return (x + m - 1) // m * m


# ----------------------------------------------------------------------------
# Kernel 1: embedding gather + masked mean
# ----------------------------------------------------------------------------
def _gather_avg_kernel(ids_ref, len_ref, emb_row_ref, avg_ref):
    """Grid = (B, S), dimension_semantics = ("parallel", "arbitrary").

    ids_ref     : (B, S) int32 SMEM (scalar prefetch; consumed by index_maps)
    len_ref     : (B,)   int32 SMEM (scalar prefetch)
    emb_row_ref : (1, 1, Dp) bf16 — embedding row ids[b, s], gathered by a
                  data-dependent BlockSpec.
    avg_ref     : (1, 1, Dp) f32 — output block for batch row b; the same
                  block is revisited across the s axis so it doubles as the
                  running-sum accumulator.
    """
    del ids_ref  # only used by the index_maps
    b = pl.program_id(0)
    s = pl.program_id(1)

    @pl.when(s == 0)
    def _init():
        avg_ref[...] = jnp.zeros_like(avg_ref)

    # Padded positions hold token id 0 and emb row 0 is all-zero
    # (padding_idx=0 invariant), so they add nothing to the sum.
    avg_ref[...] += emb_row_ref[...].astype(jnp.float32)

    @pl.when(s == pl.num_programs(1) - 1)
    def _finalize():
        denom = jnp.maximum(len_ref[b], 1).astype(jnp.float32)
        avg_ref[...] = avg_ref[...] / denom          # exact divide


# ----------------------------------------------------------------------------
# Kernel 2: MLP head (linear1 -> ReLU -> linear2 [-> softmax])
# ----------------------------------------------------------------------------
def _mlp_kernel(avg_ref, w1_ref, b1_ref, w2_ref, b2_ref, out_ref, *,
                n_classes, is_prob):
    """Grid = (nb,).  avg_ref: (TB, Dp) f32; weights bf16; out_ref (TB, Cp) f32."""
    avg = avg_ref[...].astype(jnp.bfloat16)
    h = jnp.dot(avg, w1_ref[...], preferred_element_type=jnp.float32) + b1_ref[...]
    h = jnp.maximum(h, 0.0).astype(jnp.bfloat16)
    logits = jnp.dot(h, w2_ref[...], preferred_element_type=jnp.float32) + b2_ref[...]

    if is_prob:
        # Mask padded class lanes, then an EXACT softmax (rows sum to 1).
        lane = lax.broadcasted_iota(jnp.int32, logits.shape, 1)
        logits = jnp.where(lane < n_classes, logits, -1e30)
        m = jnp.max(logits, axis=-1, keepdims=True)
        e = jnp.exp(logits - m)
        logits = e / jnp.sum(e, axis=-1, keepdims=True)

    out_ref[...] = logits


# ----------------------------------------------------------------------------
# Host-side parameter preparation (pad to lane-friendly shapes, cast bf16)
# ----------------------------------------------------------------------------
def prepare_params(params):
    emb, w1, b1, w2, b2 = (params[k] for k in ("emb", "w1", "b1", "w2", "b2"))
    V, D = emb.shape
    H = w1.shape[1]
    C = w2.shape[1]
    Dp = _round_up(D, 128)
    Hp = _round_up(H, 128)
    Cp = _round_up(C, 128)

    # Enforce the nn.Embedding(padding_idx=0) invariant: row 0 is exactly zero
    # (the kernel relies on it instead of a per-position padding mask).
    emb = emb.at[0].set(0.0)

    def pad2(x, r, c):
        return jnp.pad(x, ((0, r - x.shape[0]), (0, c - x.shape[1])))

    return {
        # (V, 1, Dp) so the gathered block (1, 1, Dp) matches the array's last
        # two dims (satisfies the (8, 128) block rule).
        "emb": pad2(emb, V, Dp).astype(jnp.bfloat16).reshape(V, 1, Dp),
        "w1": pad2(w1, Dp, Hp).astype(jnp.bfloat16),
        "b1": pad2(b1, 1, Hp).astype(jnp.float32),
        "w2": pad2(w2, Hp, Cp).astype(jnp.bfloat16),
        "b2": pad2(b2, 1, Cp).astype(jnp.float32),
        "n_classes": C,
    }


# ----------------------------------------------------------------------------
# Wrappers
# ----------------------------------------------------------------------------
def dan_forward_full(padded, input_text, text_len, is_prob=False, *,
                     max_batch_tile=128):
    """Intended DAN forward as two Pallas kernels. Returns (B, n_classes) f32."""
    emb, w1, b1, w2, b2 = (padded[k] for k in ("emb", "w1", "b1", "w2", "b2"))
    n_classes = padded["n_classes"]

    B, S = input_text.shape
    _, _, Dp = emb.shape
    Hp = w1.shape[1]
    Cp = w2.shape[1]

    ids = input_text.astype(jnp.int32)
    lens = text_len.astype(jnp.int32).reshape(B)

    # ---- kernel 1: gather + mean (grid = (B, S), data-dependent emb index) --
    avg = pl.pallas_call(
        _gather_avg_kernel,
        out_shape=jax.ShapeDtypeStruct((B, 1, Dp), jnp.float32),
        grid_spec=pltpu.PrefetchScalarGridSpec(
            num_scalar_prefetch=2,
            grid=(B, S),
            in_specs=[
                # Gather: block index along vocab = ids[b, s] (block size 1).
                pl.BlockSpec((1, 1, Dp),
                             lambda b, s, ids_r, lens_r: (ids_r[b, s], 0, 0)),
            ],
            out_specs=pl.BlockSpec((1, 1, Dp),
                                   lambda b, s, ids_r, lens_r: (b, 0, 0)),
        ),
        compiler_params=pltpu.CompilerParams(
            dimension_semantics=("parallel", "arbitrary")),
    )(ids, lens, emb)
    avg = avg.reshape(B, Dp)

    # ---- kernel 2: MLP head, batch-tiled so the MXU sees M = batch_tile -----
    batch_tile = min(max_batch_tile, _round_up(B, 8))
    Bp = _round_up(B, batch_tile)
    avg_p = jnp.zeros((Bp, Dp), jnp.float32).at[:B].set(avg)
    nb = Bp // batch_tile

    kernel = functools.partial(_mlp_kernel, n_classes=n_classes, is_prob=is_prob)
    out = pl.pallas_call(
        kernel,
        out_shape=jax.ShapeDtypeStruct((Bp, Cp), jnp.float32),
        grid_spec=pltpu.PrefetchScalarGridSpec(
            num_scalar_prefetch=0,
            grid=(nb,),
            in_specs=[
                pl.BlockSpec((batch_tile, Dp), lambda i: (i, 0)),   # avg
                pl.BlockSpec((Dp, Hp), lambda i: (0, 0)),           # w1 (resident)
                pl.BlockSpec((1, Hp), lambda i: (0, 0)),            # b1
                pl.BlockSpec((Hp, Cp), lambda i: (0, 0)),           # w2
                pl.BlockSpec((1, Cp), lambda i: (0, 0)),            # b2
            ],
            out_specs=pl.BlockSpec((batch_tile, Cp), lambda i: (i, 0)),
        ),
        compiler_params=pltpu.CompilerParams(dimension_semantics=("parallel",)),
    )(avg_p, w1, b1, w2, b2)

    return out[:B, :n_classes]


def dan_forward_literal(n_classes, input_text=None, text_len=None, is_prob=False):
    """Exact semantics of the provided (skeleton) DanModel.forward(): a zero
    vector of shape (n_classes,), softmax'd if is_prob.  Plain JAX — a tiny
    constant softmax is not worth a Pallas launch."""
    del input_text, text_len  # unused in the reference forward()
    logits = jnp.zeros((n_classes,), dtype=jnp.float32)
    if is_prob:
        logits = jax.nn.softmax(logits)
    return logits


# ----------------------------------------------------------------------------
# Pure-JAX reference for the full DAN path (correctness checking only)
# ----------------------------------------------------------------------------
def _reference_full(params, input_text, text_len, is_prob=False):
    emb = params["emb"].astype(jnp.bfloat16)
    w1 = params["w1"].astype(jnp.bfloat16)
    w2 = params["w2"].astype(jnp.bfloat16)
    b1 = params["b1"][0]
    b2 = params["b2"][0]
    S = input_text.shape[1]
    gathered = emb[input_text].astype(jnp.float32)                     # (B, S, D)
    mask = (jnp.arange(S)[None, :] < text_len[:, None]).astype(jnp.float32)
    summed = (gathered * mask[:, :, None]).sum(axis=1)
    denom = jnp.maximum(text_len.astype(jnp.float32), 1.0)[:, None]
    avg = (summed / denom).astype(jnp.bfloat16)
    h = jnp.dot(avg, w1, preferred_element_type=jnp.float32) + b1
    h = jnp.maximum(h, 0.0).astype(jnp.bfloat16)
    logits = jnp.dot(h, w2, preferred_element_type=jnp.float32) + b2
    if is_prob:
        logits = jax.nn.softmax(logits, axis=-1)
    return logits


# ----------------------------------------------------------------------------
# Deterministic parameter init (shapes from DanModel.__init__)
# ----------------------------------------------------------------------------
def init_params(key, vocab_size, emb_dim, n_hidden, n_classes):
    k_emb, k_w1, k_b1, k_w2, k_b2 = jax.random.split(key, 5)
    emb = 0.1 * jax.random.normal(k_emb, (vocab_size, emb_dim), jnp.float32)
    emb = emb.at[0].set(0.0)  # padding_idx=0
    w1 = 0.1 * jax.random.normal(k_w1, (emb_dim, n_hidden), jnp.float32)
    b1 = 0.1 * jax.random.normal(k_b1, (1, n_hidden), jnp.float32)
    w2 = 0.1 * jax.random.normal(k_w2, (n_hidden, n_classes), jnp.float32)
    b2 = 0.1 * jax.random.normal(k_b2, (1, n_classes), jnp.float32)
    return {"emb": emb, "w1": w1, "b1": b1, "w2": w2, "b2": b2}


# ----------------------------------------------------------------------------
if __name__ == "__main__":
    # Small shapes consistent with the module (batch=2, seq=8; emb/hidden defaults).
    B, S = 2, 8
    VOCAB, EMB_DIM, N_HIDDEN, N_CLASSES = 300, 50, 50, 20

    key = jax.random.PRNGKey(0)
    k_params, k_ids = jax.random.split(key)
    params = init_params(k_params, VOCAB, EMB_DIM, N_HIDDEN, N_CLASSES)
    padded = prepare_params(params)

    # Token ids in [1, VOCAB); positions >= text_len hold the padding id 0.
    input_text = jax.random.randint(k_ids, (B, S), 1, VOCAB, dtype=jnp.int32)
    text_len = jnp.array([8, 5], dtype=jnp.int32)
    pad_mask = jnp.arange(S)[None, :] < text_len[:, None]
    input_text = jnp.where(pad_mask, input_text, 0)

    # --- literal skeleton forward (exact reference semantics, no kernel) -----
    logits_lit = dan_forward_literal(N_CLASSES, input_text, text_len, is_prob=False)
    probs_lit = dan_forward_literal(N_CLASSES, input_text, text_len, is_prob=True)
    assert logits_lit.shape == (N_CLASSES,) and logits_lit.dtype == jnp.float32
    assert jnp.allclose(logits_lit, jnp.zeros((N_CLASSES,), jnp.float32))
    assert jnp.allclose(probs_lit, jnp.full((N_CLASSES,), 1.0 / N_CLASSES), atol=1e-6)

    # --- full DAN kernels -----------------------------------------------------
    logits_full = jax.block_until_ready(
        dan_forward_full(padded, input_text, text_len, is_prob=False))
    probs_full = jax.block_until_ready(
        dan_forward_full(padded, input_text, text_len, is_prob=True))

    ref_logits = _reference_full(params, input_text, text_len, is_prob=False)
    ref_probs = _reference_full(params, input_text, text_len, is_prob=True)

    assert logits_full.shape == (B, N_CLASSES) and logits_full.dtype == jnp.float32
    assert jnp.allclose(logits_full, ref_logits, rtol=5e-3, atol=5e-3), "logits mismatch"
    assert jnp.allclose(probs_full, ref_probs, rtol=5e-3, atol=5e-3), "probs mismatch"
    assert jnp.allclose(jnp.sum(probs_full, axis=-1), 1.0, atol=1e-3)

    print("KERNEL_OK")
</pallas_src>

<mosaic_0001>
module attributes {stable_mosaic.version = 11 : i64} {
  func.func @_gather_avg_kernel(%arg0: i32, %arg1: i32, %arg2: memref<2x8xi32, #tpu.memory_space<smem>>, %arg3: memref<2xi32, #tpu.memory_space<smem>>, %arg4: memref<1x1x128xbf16, #tpu.memory_space<vmem>>, %arg5: memref<1x1x128xf32, #tpu.memory_space<vmem>>) attributes {dimension_semantics = [#tpu.dimension_semantics<parallel>, #tpu.dimension_semantics<arbitrary>], iteration_bounds = array<i64: 2, 8>, scalar_prefetch = 2 : i64, scratch_operands = 0 : i64, tpu.core_type = #tpu.core_type<tc>, window_params = [{transform_indices = @transform_0, window_bounds = array<i64: 1, 1, 128>}, {transform_indices = @transform_1, window_bounds = array<i64: 1, 1, 128>}]} {
    %c0_i32 = arith.constant 0 : i32
    %0 = arith.cmpi eq, %arg1, %c0_i32 : i32
    %1 = arith.extui %0 : i1 to i32
    %c0_i32_0 = arith.constant 0 : i32
    %2 = arith.cmpi ne, %1, %c0_i32_0 : i32
    scf.if %2 {
      %cst = arith.constant 0.000000e+00 : f32
      %11 = vector.broadcast %cst : f32 to vector<1x1x128xf32>
      %c0_10 = arith.constant 0 : index
      %c0_11 = arith.constant 0 : index
      %c0_12 = arith.constant 0 : index
      %12 = vector.load %arg5[%c0_10, %c0_11, %c0_12] : memref<1x1x128xf32, #tpu.memory_space<vmem>>, vector<1x1x128xf32>
      tpu.vector_store %arg5[%c0_10, %c0_11, %c0_12], %11 {strides = array<i32>} : memref<1x1x128xf32, #tpu.memory_space<vmem>>, vector<1x1x128xf32>,
    } else {
    }
    %c0 = arith.constant 0 : index
    %c0_1 = arith.constant 0 : index
    %c0_2 = arith.constant 0 : index
    %3 = vector.load %arg5[%c0, %c0_1, %c0_2] : memref<1x1x128xf32, #tpu.memory_space<vmem>>, vector<1x1x128xf32>
    %c0_3 = arith.constant 0 : index
    %c0_4 = arith.constant 0 : index
    %c0_5 = arith.constant 0 : index
    %4 = vector.load %arg4[%c0_3, %c0_4, %c0_5] : memref<1x1x128xbf16, #tpu.memory_space<vmem>>, vector<1x1x128xbf16>
    %5 = arith.extf %4 : vector<1x1x128xbf16> to vector<1x1x128xf32>
    %6 = arith.addf %3, %5 : vector<1x1x128xf32>
    %c0_6 = arith.constant 0 : index
    %c0_7 = arith.constant 0 : index
    %c0_8 = arith.constant 0 : index
    %7 = vector.load %arg5[%c0_6, %c0_7, %c0_8] : memref<1x1x128xf32, #tpu.memory_space<vmem>>, vector<1x1x128xf32>
    tpu.vector_store %arg5[%c0_6, %c0_7, %c0_8], %6 {strides = array<i32>} : memref<1x1x128xf32, #tpu.memory_space<vmem>>, vector<1x1x128xf32>,
    %c7_i32 = arith.constant 7 : i32
    %8 = arith.cmpi eq, %arg1, %c7_i32 : i32
    %9 = arith.extui %8 : i1 to i32
    %c0_i32_9 = arith.constant 0 : i32
    %10 = arith.cmpi ne, %9, %c0_i32_9 : i32
    scf.if %10 {
      %11 = arith.index_cast %arg0 : i32 to index
      %12 = memref.load %arg3[%11] : memref<2xi32, #tpu.memory_space<smem>>
      %c1_i32 = arith.constant 1 : i32
      %13 = arith.maxsi %12, %c1_i32 : i32
      %14 = arith.sitofp %13 : i32 to f32
      %c0_10 = arith.constant 0 : index
      %c0_11 = arith.constant 0 : index
      %c0_12 = arith.constant 0 : index
      %15 = vector.load %arg5[%c0_10, %c0_11, %c0_12] : memref<1x1x128xf32, #tpu.memory_space<vmem>>, vector<1x1x128xf32>
      %16 = vector.broadcast %14 : f32 to vector<1x1x128xf32>
      %17 = arith.divf %15, %16 : vector<1x1x128xf32>
      %c0_13 = arith.constant 0 : index
      %c0_14 = arith.constant 0 : index
      %c0_15 = arith.constant 0 : index
      %18 = vector.load %arg5[%c0_13, %c0_14, %c0_15] : memref<1x1x128xf32, #tpu.memory_space<vmem>>, vector<1x1x128xf32>
      tpu.vector_store %arg5[%c0_13, %c0_14, %c0_15], %17 {strides = array<i32>} : memref<1x1x128xf32, #tpu.memory_space<vmem>>, vector<1x1x128xf32>,
    } else {
    }
    return
  }
  func.func @transform_0(%arg0: i32, %arg1: i32, %arg2: memref<2x8xi32, #tpu.memory_space<smem>>, %arg3: memref<2xi32, #tpu.memory_space<smem>>) -> (i32, i32, i32) {
    %0 = arith.index_cast %arg0 : i32 to index
    %1 = arith.index_cast %arg1 : i32 to index
    %2 = memref.load %arg2[%0, %1] : memref<2x8xi32, #tpu.memory_space<smem>>
    %c0_i32 = arith.constant 0 : i32
    %c0_i32_0 = arith.constant 0 : i32
    %c0_i32_1 = arith.constant 0 : i32
    return %2, %c0_i32, %c0_i32_0 : i32, i32, i32
  }
  func.func @transform_1(%arg0: i32, %arg1: i32, %arg2: memref<2x8xi32, #tpu.memory_space<smem>>, %arg3: memref<2xi32, #tpu.memory_space<smem>>) -> (i32, i32, i32) {
    %c0_i32 = arith.constant 0 : i32
    %c0_i32_0 = arith.constant 0 : i32
    %c0_i32_1 = arith.constant 0 : i32
    return %arg0, %c0_i32, %c0_i32_0 : i32, i32, i32
  }
}

</mosaic_0001>

<llo_original>
// kernel: tpu_custom_call.1
$region0: #{tpu_custom_call.1}
  #allocation0 [shape = 'u32[]', space=smem, size = 0x4, offset = 0x4, fixed_abs, tag = 'smem constant byte address 0x4 - core index']
  #allocation1 [shape = 'u32[144,128]{1,0:T(1,128)}', space=vmem, size = 0x12000, scoped, tag = 'internal scratch']
  #allocation2 [shape = 's32[1]{0}', space=sflag, size = 0x4, scoped, tag = 'scoped memory for tpu_custom_call.1']
  #allocation3 [shape = 'u8[1024]{0}', space=smem, size = 0x400, scoped, tag = 'prefetched SMEM operand 0']
  #allocation4 [shape = 'u8[512]{0}', space=smem, size = 0x200, scoped, tag = 'prefetched SMEM operand 1']
  %s0 = inlined_call_operand.vmem [shape: s32[2,8], index: 0, kind: input, shape index: {}]
  %s1 = inlined_call_operand.vmem [shape: s32[2], index: 1, kind: input, shape index: {}]
  %s2 = inlined_call_operand.vmem [shape: bf16[300,1,128], index: 2, kind: input, shape index: {}]
  %s3 = inlined_call_operand.hbm [shape: f32[2,1,128], index: 3, kind: output, shape index: {}]
  %s4 = sld [smem:[#allocation0]]
  $region45: #{tpu_custom_call.1} parent=0
    _
  %s6 = ssub.s32 1, %s4
  %s7 = scalar_select 0, %s6, %s4
  %s8 = sshll.u32 %s0, 4
  %s9 = int_to_ptr.vmem [resolvable:$true] %s8
  %11 = dma.vmem_to_smem %s9, 32, [#allocation3], [#allocation2]
  %s12 = sshll.u32 %s1, 4
  %s13 = int_to_ptr.vmem [resolvable:$true] %s12
  %15 = dma.vmem_to_smem %s13, 16, [#allocation4], [#allocation2]
  %16 = dma.done [#allocation2], 48
  %17 = sfence
  $region1: #{tpu_custom_call.1} parent=0
    #allocation5 [shape = 'u8[1024]{0}', space=vmem, size = 0x400, scoped, tag = 'output window, operand 0']
    #allocation6 [shape = 's32[2]{0}', space=sflag, size = 0x8, scoped, tag = 'scoped memory for tpu_custom_call.1']
    %18 = vsyncpa [#allocation6], 0
    %s19 = scalar_lea.sflag [#allocation6], 1
    %20 = vsyncpa %s19, 0
    loop: start=0, step=1, limit=18
    $region2: #{tpu_custom_call.1} parent=1 // loop_pre_header
      _
    $region3: #{tpu_custom_call.1} parent=1 // loop_header
      %s22 = sphi 0, %s26
      %p23 = scmp.ge.s32.totalorder %s22, 18
      %s29 = sphi 0, %s41
      %s30 = sphi 0, %s37
      %s31 = sphi 0, %s29
      %s32 = sphi 0, %s30
      %s33 = sphi 0, %s31
      %s34 = sphi 0, %s32
      %s60 = sphi 0, %s62
      %s63 = sphi 0, %s60
      %s64 = sphi 0, %s63
      %s80 = sphi 0, %s64
      %s86 = sphi 0, %s88
      %s89 = sphi 0, %s86
      %s90 = sphi 0, %s89
      %s106 = sphi 0, %s90
    $region4: #{tpu_custom_call.1} parent=1 // loop_header_branch
      %25 = sbr.rel (%p23) target = $region8
    $region5: #{tpu_custom_call.1} parent=1 // loop_body
      %s27 = ssub.s32 %s22, 1
      %s28 = ssub.s32 %s22, 2
      %s35 = sadd.s32 1, %s30
      %p36 = scmp.ge.s32.totalorder %s35, 8
      %s37 = scalar_select %p36, 0, %s35
      %s38 = sadd.s32 1, %s29
      %s39 = scalar_select %p36, %s38, %s29
      %p40 = scmp.ge.s32.totalorder %s39, 2
      %s41 = scalar_select %p40, 0, %s39
      %s42 = sshra.s32 %s30, 7
      %s43 = sand.u32 %s30, 127
      %s44 = sadd.s32 %s42, %s29
      %s45 = smul.u32 %s44, 128
      %s46 = sshra.s32 %s30, 7
      %s47 = sand.u32 %s30, 127
      %s48 = sadd.s32 %s45, %s47
      %s49 = sld [smem:[#allocation3 + %s48]]
      %s50 = sshra.s32 %s37, 7
      %s51 = sand.u32 %s37, 127
      %s52 = sadd.s32 %s50, %s41
      %s53 = smul.u32 %s52, 128
      %s54 = sshra.s32 %s37, 7
      %s55 = sand.u32 %s37, 127
      %s56 = sadd.s32 %s53, %s55
      %s57 = sld [smem:[#allocation3 + %s56]]
      %s58 = ssub.s32 %s49, %s57
      %p59 = scmp.eq.s32.totalorder %s58, 0
      %s61 = sadd.s32 %s60, 1
      %s62 = scalar_select %p59, %s60, %s61
      %p65 = pneg %p59
      %p66 = scmp.eq.s32.totalorder %s22, 15
      %p67 = por %p65, %p66
      %p68 = scmp.ne.s32.totalorder %s60, %s63
      %p69 = scmp.eq.s32.totalorder %s22, 0
      %p70 = por %p68, %p69
      %p71 = scmp.ne.s32.totalorder %s60, %s63
      %p72 = scmp.eq.s32.totalorder %s27, 15
      %p73 = por %p71, %p72
      %p74 = scmp.ne.s32.totalorder %s63, %s64
      %p75 = scmp.eq.s32.totalorder %s27, 0
      %p76 = por %p74, %p75
      %p77 = scmp.ne.s32.totalorder %s63, %s64
      %p78 = scmp.eq.s32.totalorder %s28, 15
      %p79 = por %p77, %p78
      %p81 = scmp.ne.s32.totalorder %s64, %s80
      %p82 = scmp.eq.s32.totalorder %s28, 0
      %p83 = por %p81, %p82
      %s84 = ssub.s32 %s29, %s41
      %p85 = scmp.eq.s32.totalorder %s84, 0
      %s87 = sadd.s32 %s86, 1
      %s88 = scalar_select %p85, %s86, %s87
      %p91 = pneg %p85
      %p92 = scmp.eq.s32.totalorder %s22, 15
      %p93 = por %p91, %p92
      %p94 = scmp.ne.s32.totalorder %s86, %s89
      %p95 = scmp.eq.s32.totalorder %s22, 0
      %p96 = por %p94, %p95
      %p97 = scmp.ne.s32.totalorder %s86, %s89
      %p98 = scmp.eq.s32.totalorder %s27, 15
      %p99 = por %p97, %p98
      %p100 = scmp.ne.s32.totalorder %s89, %s90
      %p101 = scmp.eq.s32.totalorder %s27, 0
      %p102 = por %p100, %p101
      %p103 = scmp.ne.s32.totalorder %s89, %s90
      %p104 = scmp.eq.s32.totalorder %s28, 15
      %p105 = por %p103, %p104
      %p107 = scmp.ne.s32.totalorder %s90, %s106
      %p108 = scmp.eq.s32.totalorder %s28, 0
      %p109 = por %p107, %p108
      %p110 = scmp.le.s32.totalorder 1, %s22
      %p111 = scmp.lt.s32.totalorder %s22, 17
      %p112 = pnand %p110, %p111
      %p113 = pneg %p112
      // Predicated region
      $region9: #{tpu_custom_call.1} parent=5 // pred_check
        _
      $region10: #{tpu_custom_call.1} parent=5 // pred_check_branch
        %115 = sbr.rel (%p112) target = $region12
      $region11: #{tpu_custom_call.1} parent=5 // pred_region
        %s116 = ssub.s32 %s22, 1
      $region12: #{tpu_custom_call.1} parent=5 // pred_fallthru
        _
      %p117 = scmp.lt.s32.totalorder %s22, 16
      // Predicated region
      $region13: #{tpu_custom_call.1} parent=5 // pred_check
        %p118 = pneg %p117
      $region14: #{tpu_custom_call.1} parent=5 // pred_check_branch
        %120 = sbr.rel (%p118) target = $region16
      $region15: #{tpu_custom_call.1} parent=5 // pred_region
        // Predicated region
        $region17: #{tpu_custom_call.1} parent=15 // pred_check
          %p121 = pneg %p70
        $region18: #{tpu_custom_call.1} parent=15 // pred_check_branch
          %123 = sbr.rel (%p121) target = $region20
        $region19: #{tpu_custom_call.1} parent=15 // pred_region
          %s124 = sshra.s32 %s30, 7
          %s125 = sand.u32 %s30, 127
          %s126 = sadd.s32 %s124, %s29
          %s127 = smul.u32 %s126, 128
          %s128 = sshra.s32 %s30, 7
          %s129 = sand.u32 %s30, 127
          %s130 = sadd.s32 %s127, %s129
          %s131 = sld [smem:[#allocation3 + %s130]]
          %p132 = scmp.lt.s32.totalorder %s131, 299
          %s133 = scalar_select %p132, %s131, 299
          %s134 = scalar_lea.vmem %s2, %s133
          %s135 = sshra.s32 %s30, 7
          %s136 = sand.u32 %s30, 127
          %s137 = sadd.s32 %s135, %s29
          %s138 = smul.u32 %s137, 128
          %s139 = sshra.s32 %s30, 7
          %s140 = sand.u32 %s30, 127
          %s141 = sadd.s32 %s138, %s140
          %s142 = sld [smem:[#allocation3 + %s141]]
        $region20: #{tpu_custom_call.1} parent=15 // pred_fallthru
          _
      $region16: #{tpu_custom_call.1} parent=5 // pred_fallthru
        _
      %p143 = scmp.le.s32.totalorder 1, %s22
      %p144 = scmp.lt.s32.totalorder %s22, 17
      %p145 = pnand %p143, %p144
      %p146 = pneg %p145
      // Predicated region
      $region21: #{tpu_custom_call.1} parent=5 // pred_check
        _
      $region22: #{tpu_custom_call.1} parent=5 // pred_check_branch
        %148 = sbr.rel (%p145) target = $region24
      $region23: #{tpu_custom_call.1} parent=5 // pred_region
        %s149 = ssub.s32 %s22, 1
        %s150 = sshra.s32 %s32, 7
        %s151 = sand.u32 %s32, 127
        %s152 = sadd.s32 %s150, %s31
        %s153 = smul.u32 %s152, 128
        %s154 = sshra.s32 %s32, 7
        %s155 = sand.u32 %s32, 127
        %s156 = sadd.s32 %s153, %s155
        %s157 = sld [smem:[#allocation3 + %s156]]
        %p158 = scmp.lt.s32.totalorder %s157, 299
        %s159 = scalar_select %p158, %s157, 299
        %s160 = scalar_lea.vmem %s2, %s159
        %p161 = pneg %p76
        %p162 = pneg %p73
        %p163 = pneg %p102
        %p164 = pneg %p99
        %s165 = sand.u32 %s89, 1
        %s166 = scalar_lea.sflag [#allocation6], %s165
        %s167 = sand.u32 %s89, 1
        %s168 = scalar_lea.vmem [#allocation5], %s167
        %s169 = sshra.s32 %s32, 7
        %s170 = sand.u32 %s32, 127
        %s171 = sadd.s32 %s169, %s31
        %s172 = smul.u32 %s171, 128
        %s173 = sshra.s32 %s32, 7
        %s174 = sand.u32 %s32, 127
        %s175 = sadd.s32 %s172, %s174
        %s176 = sld [smem:[#allocation3 + %s175]]
        %p177 = scmp.lt.s32.totalorder %s176, 299
        %s178 = scalar_select %p177, %s176, 299
        %s179 = scalar_lea.vmem %s2, %s178
        %s180 = sshra.s32 %s32, 7
        %s181 = sand.u32 %s32, 127
        %s182 = sadd.s32 %s180, %s31
        %s183 = smul.u32 %s182, 128
        %s184 = sshra.s32 %s32, 7
        %s185 = sand.u32 %s32, 127
        %s186 = sadd.s32 %s183, %s185
        %s187 = sld [smem:[#allocation3 + %s186]]
        %p188 = scmp.eq.s32.totalorder %s32, 0
        // Predicated region
        $region25: #{tpu_custom_call.1} parent=23 // pred_check
          %p189 = pneg %p188
        $region26: #{tpu_custom_call.1} parent=23 // pred_check_branch
          %191 = sbr.rel (%p189) target = $region28
        $region27: #{tpu_custom_call.1} parent=23 // pred_region
          %192 = vst [vmem:[%s168] sm:$0x1] 0.0
        $region28: #{tpu_custom_call.1} parent=23 // pred_fallthru
          _
        %v193 = vld [vmem:[%s168] sm:$0x1]
        %v194 = vld [vmem:[%s179] sm:$0x1]
        %v195 = vunpack.c.l.bf16 %v194
        %v196 = vadd.f32 %v193, %v195
        %197 = vst [vmem:[%s168] sm:$0x1] %v196
        %p198 = scmp.eq.s32.totalorder %s32, 7
        // Predicated region
        $region29: #{tpu_custom_call.1} parent=23 // pred_check
          %p199 = pneg %p198
        $region30: #{tpu_custom_call.1} parent=23 // pred_check_branch
          %201 = sbr.rel (%p199) target = $region32
        $region31: #{tpu_custom_call.1} parent=23 // pred_region
          %s202 = sld [smem:[#allocation4 + %s31]]
          %p203 = scmp.gt.s32.totalorder %s202, 1
          %s204 = scalar_select %p203, %s202, 1
          %s205 = scvt.s32.f32 %s204
          %v206 = vld [vmem:[%s168] sm:$0x1]
          %v207 = vstv %s205
          %v208 = vrcp.pop %v207
          %v209 = vmul.f32 %v206, %v208
          %210 = vst [vmem:[%s168] sm:$0x1] %v209
        $region32: #{tpu_custom_call.1} parent=23 // pred_fallthru
          _
        %s211 = sand.u32 %s89, 1
        %s212 = scalar_lea.sflag [#allocation6], %s211
        %s213 = sand.u32 %s89, 1
        %s214 = scalar_lea.vmem [#allocation5], %s213
        // Predicated region
        $region33: #{tpu_custom_call.1} parent=23 // pred_check
          %p215 = pneg %p99
        $region34: #{tpu_custom_call.1} parent=23 // pred_check_branch
          %217 = sbr.rel (%p215) target = $region36
        $region35: #{tpu_custom_call.1} parent=23 // pred_region
          %s219 = ssub.s32 16, 16
          %220 = vsyncadd %s212, %s219
          %s221 = smul.addr %s31, 16
          %s222 = scalar_lea.hbm %s3, %s221
          %s224 = sshll.u32 %s214, 4
          %s225 = int_to_ptr.vmem [resolvable:$true] %s224
          %227 = dma.vmem_to_hbm [thread:$0]  %s225, 16, %s222, %s212
        $region36: #{tpu_custom_call.1} parent=23 // pred_fallthru
          _
      $region24: #{tpu_custom_call.1} parent=5 // pred_fallthru
        _
      %p228 = scmp.le.s32.totalorder 2, %s22
      // Predicated region
      $region37: #{tpu_custom_call.1} parent=5 // pred_check
        %p229 = pneg %p228
      $region38: #{tpu_custom_call.1} parent=5 // pred_check_branch
        %231 = sbr.rel (%p229) target = $region40
      $region39: #{tpu_custom_call.1} parent=5 // pred_region
        %s232 = ssub.s32 %s22, 2
        // Predicated region
        $region41: #{tpu_custom_call.1} parent=39 // pred_check
          %p233 = pneg %p105
        $region42: #{tpu_custom_call.1} parent=39 // pred_check_branch
          %235 = sbr.rel (%p233) target = $region44
        $region43: #{tpu_custom_call.1} parent=39 // pred_region
          %s236 = sand.u32 %s90, 1
          %s237 = scalar_lea.sflag [#allocation6], %s236
          %s238 = sand.u32 %s90, 1
          %s239 = scalar_lea.vmem [#allocation5], %s238
          %240 = dma.done %s237, 16
        $region44: #{tpu_custom_call.1} parent=39 // pred_fallthru
          _
      $region40: #{tpu_custom_call.1} parent=5 // pred_fallthru
        _
    $region6: #{tpu_custom_call.1} parent=1 // loop_footer
      %s26 = sadd.s32 1, %s22
    $region7: #{tpu_custom_call.1} parent=1 // loop_footer_branch
      %21 = sbr.rel target = $region3
    $region8: #{tpu_custom_call.1} parent=1 // loop_exit
      _
    %241 = vsyncpa [#allocation6], 1
    %s242 = scalar_lea.sflag [#allocation6], 1
    %243 = vsyncpa %s242, 1

</llo_original>
